<compile_context>
chip_gen: v7x
topology: tpu7x:2x2x1
jax: 0.10.0
libtpu: 0.0.40
codegen_flags: <defaults>
</compile_context>

<pallas_src>
import numpy as np
import jax
import jax.numpy as jnp
from jax import lax
from jax.experimental import pallas as pl
from jax.experimental.pallas import tpu as pltpu

_TAPS = tuple((dh, dw) for dh in range(3) for dw in range(3))


def _im2col_mask(N, H, W, C):
    """(N*H*W, 9*C) f32: 1 where tap (dh, dw) reads a valid pixel of the SAME-
    padded 3x3 window, 0 where the flat row shift would read padding / wrap
    rows / cross images (those positions are zeros in the torch conv)."""
    R = N * H * W
    m = np.zeros((R, 9 * C), np.float32)
    for k, (dh, dw) in enumerate(_TAPS):
        for n in range(N):
            for h in range(H):
                for w in range(W):
                    if 0 <= h + dh - 1 < H and 0 <= w + dw - 1 < W:
                        r = (n * H + h) * W + w
                        m[r, k * C:(k + 1) * C] = 1.0
    return m


def _make_resblock_kernel(N, H, W, C, eps=1e-5):
    R = N * H * W
    PAD = W + 1                      # max |flat row shift| of a 3x3 tap
    inv_r = 1.0 / R                  # python scalar -> inlined constant

    def kernel(x_ref, w1_ref, w2_ref, p_ref, m_ref, o_ref):
        x2 = x_ref[...]              # (R, C) f32, 2-D end-to-end
        mask = m_ref[...]            # (R, 9*C) boundary mask
        p = p_ref[...]               # (8, C): b1,g1,be1,b2,g2,be2,0,0
        b1, g1, be1 = p[0:1], p[1:2], p[2:3]
        b2, g2, be2 = p[3:4], p[4:5], p[5:6]

        def conv3x3(a2, w_ref, b):
            # im2col via a zero halo + 9 STATIC row slices (flat shifts),
            # one boundary-mask multiply, then ONE MXU matmul.
            # Operands kept f32 so the 1e-3 check vs the f32 reference holds;
            # cast im2col/w to bf16 here on v6e/v7x when tolerance allows.
            zpad = jnp.zeros((PAD, C), jnp.float32)
            padded = jnp.concatenate([zpad, a2, zpad], axis=0)   # (R+2*PAD, C)
            taps = []
            for dh, dw in _TAPS:
                s = (dh - 1) * W + (dw - 1)                      # static shift
                taps.append(padded[PAD + s:PAD + s + R, :])      # (R, C)
            im2col = jnp.concatenate(taps, axis=1) * mask        # (R, 9*C)
            return jnp.dot(im2col, w_ref[...],
                           preferred_element_type=jnp.float32) + b

        def batchnorm(y2, g, be):
            # training-mode BN, single reduction pass: per-channel sum & sum-sq
            s = jnp.sum(y2, axis=0, keepdims=True)
            ss = jnp.sum(y2 * y2, axis=0, keepdims=True)
            mu = s * inv_r
            var = ss * inv_r - mu * mu                           # biased var
            return (y2 - mu) * lax.rsqrt(var + eps) * g + be

        # conv1 -> bn1 -> relu
        y2 = jnp.maximum(batchnorm(conv3x3(x2, w1_ref, b1), g1, be1), 0.0)
        # conv2 -> bn2 -> +residual -> relu
        z2 = batchnorm(conv3x3(y2, w2_ref, b2), g2, be2)
        o_ref[...] = jnp.maximum(z2 + x2, 0.0)

    return kernel


def resblock_forward(x_nchw, params):
    """Pallas ResBlock forward.  x_nchw: (N, C, H, W) float32 -> (N, C, H, W)."""
    w1, b1, g1, be1, w2, b2, g2, be2 = params
    x_nchw = x_nchw.astype(jnp.float32)
    N, C, H, W = x_nchw.shape
    R = N * H * W

    # layout plumbing in XLA: NCHW -> NHWC -> one 2-D (N*H*W, C) tile
    x2 = jnp.transpose(x_nchw, (0, 2, 3, 1)).reshape(R, C)
    # HWIO (3,3,C,C) -> (9*C, C); row block k = 3*kh+kw matches the tap order
    w1m = w1.astype(jnp.float32).reshape(9 * C, C)
    w2m = w2.astype(jnp.float32).reshape(9 * C, C)
    # pack the six per-channel vectors into one sublane-aligned (8, C) input
    zeros_c = jnp.zeros((C,), jnp.float32)
    pvec = jnp.stack([b1, g1, be1, b2, g2, be2, zeros_c, zeros_c],
                     axis=0).astype(jnp.float32)
    # boundary mask as an explicit input (NOT a captured constant)
    mask = jnp.asarray(_im2col_mask(N, H, W, C))

    kernel = _make_resblock_kernel(N, H, W, C)
    vmem = lambda: pl.BlockSpec(memory_space=pltpu.MemorySpace.VMEM)

    out2 = pl.pallas_call(
        kernel,
        out_shape=jax.ShapeDtypeStruct((R, C), jnp.float32),
        in_specs=[vmem(), vmem(), vmem(), vmem(), vmem()],
        out_specs=vmem(),
    )(x2, w1m, w2m, pvec, mask)

    return jnp.transpose(out2.reshape(N, H, W, C), (0, 3, 1, 2))   # back to NCHW


def resblock_ref(x_nchw, params):
    """Pure-JAX reference (same semantics) for validation."""
    w1, b1, g1, be1, w2, b2, g2, be2 = params
    x = jnp.transpose(x_nchw, (0, 2, 3, 1)).astype(jnp.float32)

    def conv(h, w, b):
        y = lax.conv_general_dilated(h, w, (1, 1), 'SAME',
                                     dimension_numbers=('NHWC', 'HWIO', 'NHWC'))
        return y + b.reshape(1, 1, 1, -1)

    def bn(y, g, be, eps=1e-5):
        mu = jnp.mean(y, axis=(0, 1, 2), keepdims=True)
        var = jnp.mean((y - mu) ** 2, axis=(0, 1, 2), keepdims=True)
        return (y - mu) * lax.rsqrt(var + eps) * g.reshape(1, 1, 1, -1) \
            + be.reshape(1, 1, 1, -1)

    h = jax.nn.relu(bn(conv(x, w1, b1), g1, be1))
    h = bn(conv(h, w2, b2), g2, be2) + x
    return jnp.transpose(jax.nn.relu(h), (0, 3, 1, 2))


if __name__ == "__main__":
    # Small shapes consistent with the module: batch=2, num_hidden=32, 4x4 board.
    N, C, H, W = 2, 32, 4, 4

    key = jax.random.PRNGKey(0)
    kx, kw1, kb1, kw2, kb2 = jax.random.split(key, 5)
    fan_in = C * 3 * 3
    scale = 1.0 / (fan_in ** 0.5)

    x = jax.random.normal(kx, (N, C, H, W), jnp.float32)            # NCHW input
    w1 = jax.random.normal(kw1, (3, 3, C, C), jnp.float32) * scale  # HWIO
    b1 = jax.random.normal(kb1, (C,), jnp.float32) * scale
    w2 = jax.random.normal(kw2, (3, 3, C, C), jnp.float32) * scale
    b2 = jax.random.normal(kb2, (C,), jnp.float32) * scale
    g1 = jnp.ones((C,), jnp.float32)                                 # BN defaults
    be1 = jnp.zeros((C,), jnp.float32)
    g2 = jnp.ones((C,), jnp.float32)
    be2 = jnp.zeros((C,), jnp.float32)
    params = (w1, b1, g1, be1, w2, b2, g2, be2)

    out = jax.block_until_ready(resblock_forward(x, params))
    ref = jax.block_until_ready(resblock_ref(x, params))

    assert out.shape == (N, C, H, W), out.shape
    np.testing.assert_allclose(np.asarray(out), np.asarray(ref),
                               atol=1e-3, rtol=1e-3)
    print("KERNEL_OK")
</pallas_src>

<mosaic_0001>
module attributes {stable_mosaic.version = 11 : i64} {
  func.func @kernel(%arg0: memref<32x32xf32, #tpu.memory_space<vmem>>, %arg1: memref<288x32xf32, #tpu.memory_space<vmem>>, %arg2: memref<288x32xf32, #tpu.memory_space<vmem>>, %arg3: memref<8x32xf32, #tpu.memory_space<vmem>>, %arg4: memref<32x288xf32, #tpu.memory_space<vmem>>, %arg5: memref<32x32xf32, #tpu.memory_space<vmem>>) attributes {dimension_semantics = [], scalar_prefetch = 0 : i64, scratch_operands = 0 : i64, tpu.core_type = #tpu.core_type<tc>} {
    %c0 = arith.constant 0 : index
    %c0_0 = arith.constant 0 : index
    %0 = vector.load %arg0[%c0, %c0_0] : memref<32x32xf32, #tpu.memory_space<vmem>>, vector<32x32xf32>
    %c0_1 = arith.constant 0 : index
    %c0_2 = arith.constant 0 : index
    %1 = vector.load %arg4[%c0_1, %c0_2] : memref<32x288xf32, #tpu.memory_space<vmem>>, vector<32x288xf32>
    %c0_3 = arith.constant 0 : index
    %c0_4 = arith.constant 0 : index
    %2 = vector.load %arg3[%c0_3, %c0_4] : memref<8x32xf32, #tpu.memory_space<vmem>>, vector<8x32xf32>
    %3 = vector.extract_strided_slice %2 {offsets = [0, 0], sizes = [1, 32], strides = [1, 1]} : vector<8x32xf32> to vector<1x32xf32>
    %4 = vector.extract_strided_slice %2 {offsets = [1, 0], sizes = [1, 32], strides = [1, 1]} : vector<8x32xf32> to vector<1x32xf32>
    %5 = vector.extract_strided_slice %2 {offsets = [2, 0], sizes = [1, 32], strides = [1, 1]} : vector<8x32xf32> to vector<1x32xf32>
    %6 = vector.extract_strided_slice %2 {offsets = [3, 0], sizes = [1, 32], strides = [1, 1]} : vector<8x32xf32> to vector<1x32xf32>
    %7 = vector.extract_strided_slice %2 {offsets = [4, 0], sizes = [1, 32], strides = [1, 1]} : vector<8x32xf32> to vector<1x32xf32>
    %8 = vector.extract_strided_slice %2 {offsets = [5, 0], sizes = [1, 32], strides = [1, 1]} : vector<8x32xf32> to vector<1x32xf32>
    %cst = arith.constant 0.000000e+00 : f32
    %9 = vector.broadcast %cst : f32 to vector<5x32xf32>
    %10 = tpu.concatenate %9, %0, %9 in 0 : vector<5x32xf32>, vector<32x32xf32>, vector<5x32xf32> -> vector<42x32xf32>
    %11 = vector.extract_strided_slice %10 {offsets = [0, 0], sizes = [32, 32], strides = [1, 1]} : vector<42x32xf32> to vector<32x32xf32>
    %12 = vector.extract_strided_slice %10 {offsets = [1, 0], sizes = [32, 32], strides = [1, 1]} : vector<42x32xf32> to vector<32x32xf32>
    %13 = vector.extract_strided_slice %10 {offsets = [2, 0], sizes = [32, 32], strides = [1, 1]} : vector<42x32xf32> to vector<32x32xf32>
    %14 = vector.extract_strided_slice %10 {offsets = [4, 0], sizes = [32, 32], strides = [1, 1]} : vector<42x32xf32> to vector<32x32xf32>
    %15 = vector.extract_strided_slice %10 {offsets = [5, 0], sizes = [32, 32], strides = [1, 1]} : vector<42x32xf32> to vector<32x32xf32>
    %16 = vector.extract_strided_slice %10 {offsets = [6, 0], sizes = [32, 32], strides = [1, 1]} : vector<42x32xf32> to vector<32x32xf32>
    %17 = vector.extract_strided_slice %10 {offsets = [8, 0], sizes = [32, 32], strides = [1, 1]} : vector<42x32xf32> to vector<32x32xf32>
    %18 = vector.extract_strided_slice %10 {offsets = [9, 0], sizes = [32, 32], strides = [1, 1]} : vector<42x32xf32> to vector<32x32xf32>
    %19 = vector.extract_strided_slice %10 {offsets = [10, 0], sizes = [32, 32], strides = [1, 1]} : vector<42x32xf32> to vector<32x32xf32>
    %20 = tpu.concatenate %11, %12, %13, %14, %15, %16, %17, %18, %19 in 1 : vector<32x32xf32>, vector<32x32xf32>, vector<32x32xf32>, vector<32x32xf32>, vector<32x32xf32>, vector<32x32xf32>, vector<32x32xf32>, vector<32x32xf32>, vector<32x32xf32> -> vector<32x288xf32>
    %21 = arith.mulf %20, %1 : vector<32x288xf32>
    %c0_5 = arith.constant 0 : index
    %c0_6 = arith.constant 0 : index
    %22 = vector.load %arg1[%c0_5, %c0_6] : memref<288x32xf32, #tpu.memory_space<vmem>>, vector<288x32xf32>
    %cst_7 = arith.constant dense<0.000000e+00> : vector<32x32xf32>
    %23 = tpu.matmul %21, %22, %cst_7 {dimension_numbers = #tpu.dot_dimension_numbers<[1], [0], [0], [1], [0, 0, 1, 1], [], []>} : vector<32x288xf32>, vector<288x32xf32>, vector<32x32xf32> -> vector<32x32xf32>
    %24 = vector.broadcast %3 : vector<1x32xf32> to vector<32x32xf32>
    %25 = arith.addf %23, %24 : vector<32x32xf32>
    %cst_8 = arith.constant dense<0.000000e+00> : vector<32xf32>
    %26 = vector.multi_reduction <add>, %25, %cst_8 [0] : vector<32x32xf32> to vector<32xf32>
    %27 = vector.shape_cast %26 : vector<32xf32> to vector<1x32xf32>
    %28 = arith.mulf %25, %25 : vector<32x32xf32>
    %cst_9 = arith.constant dense<0.000000e+00> : vector<32xf32>
    %29 = vector.multi_reduction <add>, %28, %cst_9 [0] : vector<32x32xf32> to vector<32xf32>
    %30 = vector.shape_cast %29 : vector<32xf32> to vector<1x32xf32>
    %cst_10 = arith.constant 3.125000e-02 : f32
    %31 = vector.broadcast %cst_10 : f32 to vector<1x32xf32>
    %32 = arith.mulf %27, %31 : vector<1x32xf32>
    %cst_11 = arith.constant 3.125000e-02 : f32
    %33 = vector.broadcast %cst_11 : f32 to vector<1x32xf32>
    %34 = arith.mulf %30, %33 : vector<1x32xf32>
    %35 = arith.mulf %32, %32 : vector<1x32xf32>
    %36 = arith.subf %34, %35 : vector<1x32xf32>
    %37 = vector.broadcast %32 : vector<1x32xf32> to vector<32x32xf32>
    %38 = arith.subf %25, %37 : vector<32x32xf32>
    %cst_12 = arith.constant 9.99999974E-6 : f32
    %39 = vector.broadcast %cst_12 : f32 to vector<1x32xf32>
    %40 = arith.addf %36, %39 : vector<1x32xf32>
    %41 = math.rsqrt %40 : vector<1x32xf32>
    %42 = vector.broadcast %41 : vector<1x32xf32> to vector<32x32xf32>
    %43 = arith.mulf %38, %42 : vector<32x32xf32>
    %44 = vector.broadcast %4 : vector<1x32xf32> to vector<32x32xf32>
    %45 = arith.mulf %43, %44 : vector<32x32xf32>
    %46 = vector.broadcast %5 : vector<1x32xf32> to vector<32x32xf32>
    %47 = arith.addf %45, %46 : vector<32x32xf32>
    %cst_13 = arith.constant 0.000000e+00 : f32
    %48 = vector.broadcast %cst_13 : f32 to vector<32x32xf32>
    %49 = arith.maximumf %47, %48 : vector<32x32xf32>
    %cst_14 = arith.constant 0.000000e+00 : f32
    %50 = vector.broadcast %cst_14 : f32 to vector<5x32xf32>
    %51 = tpu.concatenate %50, %49, %50 in 0 : vector<5x32xf32>, vector<32x32xf32>, vector<5x32xf32> -> vector<42x32xf32>
    %52 = vector.extract_strided_slice %51 {offsets = [0, 0], sizes = [32, 32], strides = [1, 1]} : vector<42x32xf32> to vector<32x32xf32>
    %53 = vector.extract_strided_slice %51 {offsets = [1, 0], sizes = [32, 32], strides = [1, 1]} : vector<42x32xf32> to vector<32x32xf32>
    %54 = vector.extract_strided_slice %51 {offsets = [2, 0], sizes = [32, 32], strides = [1, 1]} : vector<42x32xf32> to vector<32x32xf32>
    %55 = vector.extract_strided_slice %51 {offsets = [4, 0], sizes = [32, 32], strides = [1, 1]} : vector<42x32xf32> to vector<32x32xf32>
    %56 = vector.extract_strided_slice %51 {offsets = [5, 0], sizes = [32, 32], strides = [1, 1]} : vector<42x32xf32> to vector<32x32xf32>
    %57 = vector.extract_strided_slice %51 {offsets = [6, 0], sizes = [32, 32], strides = [1, 1]} : vector<42x32xf32> to vector<32x32xf32>
    %58 = vector.extract_strided_slice %51 {offsets = [8, 0], sizes = [32, 32], strides = [1, 1]} : vector<42x32xf32> to vector<32x32xf32>
    %59 = vector.extract_strided_slice %51 {offsets = [9, 0], sizes = [32, 32], strides = [1, 1]} : vector<42x32xf32> to vector<32x32xf32>
    %60 = vector.extract_strided_slice %51 {offsets = [10, 0], sizes = [32, 32], strides = [1, 1]} : vector<42x32xf32> to vector<32x32xf32>
    %61 = tpu.concatenate %52, %53, %54, %55, %56, %57, %58, %59, %60 in 1 : vector<32x32xf32>, vector<32x32xf32>, vector<32x32xf32>, vector<32x32xf32>, vector<32x32xf32>, vector<32x32xf32>, vector<32x32xf32>, vector<32x32xf32>, vector<32x32xf32> -> vector<32x288xf32>
    %62 = arith.mulf %61, %1 : vector<32x288xf32>
    %c0_15 = arith.constant 0 : index
    %c0_16 = arith.constant 0 : index
    %63 = vector.load %arg2[%c0_15, %c0_16] : memref<288x32xf32, #tpu.memory_space<vmem>>, vector<288x32xf32>
    %cst_17 = arith.constant dense<0.000000e+00> : vector<32x32xf32>
    %64 = tpu.matmul %62, %63, %cst_17 {dimension_numbers = #tpu.dot_dimension_numbers<[1], [0], [0], [1], [0, 0, 1, 1], [], []>} : vector<32x288xf32>, vector<288x32xf32>, vector<32x32xf32> -> vector<32x32xf32>
    %65 = vector.broadcast %6 : vector<1x32xf32> to vector<32x32xf32>
    %66 = arith.addf %64, %65 : vector<32x32xf32>
    %cst_18 = arith.constant dense<0.000000e+00> : vector<32xf32>
    %67 = vector.multi_reduction <add>, %66, %cst_18 [0] : vector<32x32xf32> to vector<32xf32>
    %68 = vector.shape_cast %67 : vector<32xf32> to vector<1x32xf32>
    %69 = arith.mulf %66, %66 : vector<32x32xf32>
    %cst_19 = arith.constant dense<0.000000e+00> : vector<32xf32>
    %70 = vector.multi_reduction <add>, %69, %cst_19 [0] : vector<32x32xf32> to vector<32xf32>
    %71 = vector.shape_cast %70 : vector<32xf32> to vector<1x32xf32>
    %cst_20 = arith.constant 3.125000e-02 : f32
    %72 = vector.broadcast %cst_20 : f32 to vector<1x32xf32>
    %73 = arith.mulf %68, %72 : vector<1x32xf32>
    %cst_21 = arith.constant 3.125000e-02 : f32
    %74 = vector.broadcast %cst_21 : f32 to vector<1x32xf32>
    %75 = arith.mulf %71, %74 : vector<1x32xf32>
    %76 = arith.mulf %73, %73 : vector<1x32xf32>
    %77 = arith.subf %75, %76 : vector<1x32xf32>
    %78 = vector.broadcast %73 : vector<1x32xf32> to vector<32x32xf32>
    %79 = arith.subf %66, %78 : vector<32x32xf32>
    %cst_22 = arith.constant 9.99999974E-6 : f32
    %80 = vector.broadcast %cst_22 : f32 to vector<1x32xf32>
    %81 = arith.addf %77, %80 : vector<1x32xf32>
    %82 = math.rsqrt %81 : vector<1x32xf32>
    %83 = vector.broadcast %82 : vector<1x32xf32> to vector<32x32xf32>
    %84 = arith.mulf %79, %83 : vector<32x32xf32>
    %85 = vector.broadcast %7 : vector<1x32xf32> to vector<32x32xf32>
    %86 = arith.mulf %84, %85 : vector<32x32xf32>
    %87 = vector.broadcast %8 : vector<1x32xf32> to vector<32x32xf32>
    %88 = arith.addf %86, %87 : vector<32x32xf32>
    %89 = arith.addf %88, %0 : vector<32x32xf32>
    %cst_23 = arith.constant 0.000000e+00 : f32
    %90 = vector.broadcast %cst_23 : f32 to vector<32x32xf32>
    %91 = arith.maximumf %89, %90 : vector<32x32xf32>
    %c0_24 = arith.constant 0 : index
    %c0_25 = arith.constant 0 : index
    %92 = vector.load %arg5[%c0_24, %c0_25] : memref<32x32xf32, #tpu.memory_space<vmem>>, vector<32x32xf32>
    tpu.vector_store %arg5[%c0_24, %c0_25], %91 {strides = array<i32>} : memref<32x32xf32, #tpu.memory_space<vmem>>, vector<32x32xf32>,
    return
  }
}

</mosaic_0001>

<llo_original>
// kernel: tpu_custom_call.1
$region0: #{tpu_custom_call.1}
  #allocation0 [shape = 'u32[]', space=smem, size = 0x4, offset = 0x4, fixed_abs, tag = 'smem constant byte address 0x4 - core index']
  #allocation1 [shape = 'u32[144,128]{1,0:T(1,128)}', space=vmem, size = 0x12000, scoped, tag = 'internal scratch']
  %s0 = inlined_call_operand.vmem [shape: f32[32,32], index: 0, kind: input, shape index: {}]
  %s1 = inlined_call_operand.vmem [shape: f32[288,32], index: 1, kind: input, shape index: {}]
  %s2 = inlined_call_operand.vmem [shape: f32[288,32], index: 2, kind: input, shape index: {}]
  %s3 = inlined_call_operand.vmem [shape: f32[8,32], index: 3, kind: input, shape index: {}]
  %s4 = inlined_call_operand.vmem [shape: f32[32,288], index: 4, kind: input, shape index: {}]
  %s5 = inlined_call_operand.hbm [shape: f32[32,32], index: 5, kind: output, shape index: {}]
  %s6 = sld [smem:[#allocation0]]
  $region30: #{tpu_custom_call.1} parent=0
    _
  %s8 = ssub.s32 1, %s6
  %s9 = scalar_select 0, %s8, %s6
  $region1: #{tpu_custom_call.1} parent=0
    #allocation2 [shape = 'u8[16384]{0}', space=vmem, size = 0x4000, scoped, tag = 'output window, operand 0, single buffered']
    #allocation3 [shape = 's32[1]{0}', space=sflag, size = 0x4, scoped, tag = 'scoped memory for tpu_custom_call.1']
    %10 = vsyncpa [#allocation3], 0
    // Predicated region
    $region2: #{tpu_custom_call.1} parent=1 // pred_check
      _
    $region3: #{tpu_custom_call.1} parent=1 // pred_check_branch
      %12 = sbr.rel (0) target = $region5
    $region4: #{tpu_custom_call.1} parent=1 // pred_region
      _
    $region5: #{tpu_custom_call.1} parent=1 // pred_fallthru
      _
    // Predicated region
    $region6: #{tpu_custom_call.1} parent=1 // pred_check
      _
    $region7: #{tpu_custom_call.1} parent=1 // pred_check_branch
      %14 = sbr.rel (0) target = $region9
    $region8: #{tpu_custom_call.1} parent=1 // pred_region
      _
    $region9: #{tpu_custom_call.1} parent=1 // pred_fallthru
      _
    // Predicated region
    $region10: #{tpu_custom_call.1} parent=1 // pred_check
      _
    $region11: #{tpu_custom_call.1} parent=1 // pred_check_branch
      %16 = sbr.rel (0) target = $region13
    $region12: #{tpu_custom_call.1} parent=1 // pred_region
      _
    $region13: #{tpu_custom_call.1} parent=1 // pred_fallthru
      _
    // Predicated region
    $region14: #{tpu_custom_call.1} parent=1 // pred_check
      _
    $region15: #{tpu_custom_call.1} parent=1 // pred_check_branch
      %18 = sbr.rel (0) target = $region17
    $region16: #{tpu_custom_call.1} parent=1 // pred_region
      _
    $region17: #{tpu_custom_call.1} parent=1 // pred_fallthru
      _
    // Predicated region
    $region18: #{tpu_custom_call.1} parent=1 // pred_check
      _
    $region19: #{tpu_custom_call.1} parent=1 // pred_check_branch
      %20 = sbr.rel (0) target = $region21
    $region20: #{tpu_custom_call.1} parent=1 // pred_region
      _
    $region21: #{tpu_custom_call.1} parent=1 // pred_fallthru
      _
    %v21 = vld [vmem:[%s0] sm:$0xff]
    %v22 = vld [vmem:[%s0 + $0x8] sm:$0xff]
    %v23 = vld [vmem:[%s0 + $0x10] sm:$0xff]
    %v24 = vld [vmem:[%s0 + $0x18] sm:$0xff]
    %v25 = vld [vmem:[%s4] sm:$0xff]
    %v26 = vld [vmem:[%s4 + $0x8] sm:$0xff]
    %v27 = vld [vmem:[%s4 + $0x10] sm:$0xff]
    %v28 = vld [vmem:[%s4 + $0x18] sm:$0xff]
    %v29 = vld [vmem:[%s4 + $0x20] sm:$0xff]
    %v30 = vld [vmem:[%s4 + $0x28] sm:$0xff]
    %v31 = vld [vmem:[%s4 + $0x30] sm:$0xff]
    %v32 = vld [vmem:[%s4 + $0x38] sm:$0xff]
    %v33 = vld [vmem:[%s4 + $0x40] sm:$0xff]
    %v34 = vld [vmem:[%s4 + $0x48] sm:$0xff]
    %v35 = vld [vmem:[%s4 + $0x50] sm:$0xff]
    %v36 = vld [vmem:[%s4 + $0x58] sm:$0xff]
    %v37 = vld [vmem:[%s3] sm:$0xff]
    %vm42 = vcmask 1044480
    %v43 = vrot.slane %v21, 3
    %v44 = vrot.slane %v22, 3
    %v45 = vsel %vm42, %v43, %v44
    %v46 = vrot.slane %v23, 3
    %v47 = vsel %vm42, %v44, %v46
    %v48 = vrot.slane %v24, 3
    %v49 = vsel %vm42, %v46, %v48
    %v55 = vsel %vm42, 0.0, %v43
    %v56 = vsel %vm42, %v48, 0.0
    %vm59 = vcmask 1046528
    %v60 = vrot.slane %v55, 1
    %v61 = vrot.slane %v45, 1
    %v62 = vsel %vm59, %v60, %v61
    %v63 = vrot.slane %v47, 1
    %v64 = vsel %vm59, %v61, %v63
    %v65 = vrot.slane %v49, 1
    %v66 = vsel %vm59, %v63, %v65
    %v67 = vrot.slane %v56, 1
    %v68 = vsel %vm59, %v65, %v67
    %69 = vrot.lane.b32.xlu0 %v62, 32
    %v70 = vpop.permute.xlu0 %69
    %71 = vrot.lane.b32.xlu0 %v64, 32
    %v72 = vpop.permute.xlu0 %71
    %73 = vrot.lane.b32.xlu0 %v66, 32
    %v74 = vpop.permute.xlu0 %73
    %75 = vrot.lane.b32.xlu0 %v68, 32
    %v76 = vpop.permute.xlu0 %75
    %vm81 = vcmask 1045504
    %v82 = vrot.slane %v55, 2
    %v83 = vrot.slane %v45, 2
    %v84 = vsel %vm81, %v82, %v83
    %v85 = vrot.slane %v47, 2
    %v86 = vsel %vm81, %v83, %v85
    %v87 = vrot.slane %v49, 2
    %v88 = vsel %vm81, %v85, %v87
    %v89 = vrot.slane %v56, 2
    %v90 = vsel %vm81, %v87, %v89
    %91 = vrot.lane.b32.xlu0 %v84, 64
    %v92 = vpop.permute.xlu0 %91
    %93 = vrot.lane.b32.xlu0 %v86, 64
    %v94 = vpop.permute.xlu0 %93
    %95 = vrot.lane.b32.xlu0 %v88, 64
    %v96 = vpop.permute.xlu0 %95
    %97 = vrot.lane.b32.xlu0 %v90, 64
    %v98 = vpop.permute.xlu0 %97
    %vm103 = vcmask 1043456
    %v104 = vrot.slane %v55, 4
    %v105 = vrot.slane %v45, 4
    %v106 = vsel %vm103, %v104, %v105
    %v107 = vrot.slane %v47, 4
    %v108 = vsel %vm103, %v105, %v107
    %v109 = vrot.slane %v49, 4
    %v110 = vsel %vm103, %v107, %v109
    %v111 = vrot.slane %v56, 4
    %v112 = vsel %vm103, %v109, %v111
    %113 = vrot.lane.b32.xlu0 %v106, 96
    %v114 = vpop.permute.xlu0 %113
    %115 = vrot.lane.b32.xlu0 %v108, 96
    %v116 = vpop.permute.xlu0 %115
    %117 = vrot.lane.b32.xlu0 %v110, 96
    %v118 = vpop.permute.xlu0 %117
    %119 = vrot.lane.b32.xlu0 %v112, 96
    %v120 = vpop.permute.xlu0 %119
    %vm125 = vcmask 1042432
    %v126 = vrot.slane %v55, 5
    %v127 = vrot.slane %v45, 5
    %v128 = vsel %vm125, %v126, %v127
    %v129 = vrot.slane %v47, 5
    %v130 = vsel %vm125, %v127, %v129
    %v131 = vrot.slane %v49, 5
    %v132 = vsel %vm125, %v129, %v131
    %v133 = vrot.slane %v56, 5
    %v134 = vsel %vm125, %v131, %v133
    %vm139 = vcmask 1041408
    %v140 = vrot.slane %v55, 6
    %v141 = vrot.slane %v45, 6
    %v142 = vsel %vm139, %v140, %v141
    %v143 = vrot.slane %v47, 6
    %v144 = vsel %vm139, %v141, %v143
    %v145 = vrot.slane %v49, 6
    %v146 = vsel %vm139, %v143, %v145
    %v147 = vrot.slane %v56, 6
    %v148 = vsel %vm139, %v145, %v147
    %149 = vrot.lane.b32.xlu0 %v142, 32
    %v150 = vpop.permute.xlu0 %149
    %151 = vrot.lane.b32.xlu0 %v144, 32
    %v152 = vpop.permute.xlu0 %151
    %153 = vrot.lane.b32.xlu0 %v146, 32
    %v154 = vpop.permute.xlu0 %153
    %155 = vrot.lane.b32.xlu0 %v148, 32
    %v156 = vpop.permute.xlu0 %155
    %161 = vrot.lane.b32.xlu0 %v45, 64
    %v162 = vpop.permute.xlu0 %161
    %163 = vrot.lane.b32.xlu0 %v47, 64
    %v164 = vpop.permute.xlu0 %163
    %165 = vrot.lane.b32.xlu0 %v49, 64
    %v166 = vpop.permute.xlu0 %165
    %167 = vrot.lane.b32.xlu0 %v56, 64
    %v168 = vpop.permute.xlu0 %167
    %v174 = vrot.slane 0.0, 1
    %v175 = vsel %vm59, %v67, %v174
    %176 = vrot.lane.b32.xlu0 %v64, 96
    %v177 = vpop.permute.xlu0 %176
    %178 = vrot.lane.b32.xlu0 %v66, 96
    %v179 = vpop.permute.xlu0 %178
    %180 = vrot.lane.b32.xlu0 %v68, 96
    %v181 = vpop.permute.xlu0 %180
    %182 = vrot.lane.b32.xlu0 %v175, 96
    %v183 = vpop.permute.xlu0 %182
    %v188 = vrot.slane 0.0, 2
    %v189 = vsel %vm81, %v89, %v188
    %vm194 = vcmask 261120
    %v195 = vsel %vm194, %v55, %v70
    %v196 = vsel %vm194, %v45, %v72
    %v197 = vsel %vm194, %v47, %v74
    %v198 = vsel %vm194, %v49, %v76
    %vm199 = vcmask 523264
    %v200 = vsel %vm199, %v195, %v92
    %v201 = vsel %vm199, %v196, %v94
    %v202 = vsel %vm199, %v197, %v96
    %v203 = vsel %vm199, %v198, %v98
    %vm204 = vcmask 785408
    %v205 = vsel %vm204, %v200, %v114
    %v206 = vsel %vm204, %v201, %v116
    %v207 = vsel %vm204, %v202, %v118
    %v208 = vsel %vm204, %v203, %v120
    %v209 = vsel %vm194, %v128, %v150
    %v210 = vsel %vm194, %v130, %v152
    %v211 = vsel %vm194, %v132, %v154
    %v212 = vsel %vm194, %v134, %v156
    %v213 = vsel %vm199, %v209, %v162
    %v214 = vsel %vm199, %v210, %v164
    %v215 = vsel %vm199, %v211, %v166
    %v216 = vsel %vm199, %v212, %v168
    %v217 = vsel %vm204, %v213, %v177
    %v218 = vsel %vm204, %v214, %v179
    %v219 = vsel %vm204, %v215, %v181
    %v220 = vsel %vm204, %v216, %v183
    %v221 = vmul.f32 %v205, %v25
    %v222 = vmul.f32 %v217, %v26
    %v223 = vmul.f32 %v86, %v27
    %v224 = vmul.f32 %v206, %v28
    %v225 = vmul.f32 %v218, %v29
    %v226 = vmul.f32 %v88, %v30
    %v227 = vmul.f32 %v207, %v31
    %v228 = vmul.f32 %v219, %v32
    %v229 = vmul.f32 %v90, %v33
    %v230 = vmul.f32 %v208, %v34
    %v231 = vmul.f32 %v220, %v35
    %v232 = vmul.f32 %v189, %v36
    %v233 = vld [vmem:[%s1] sm:$0xff]
    %v234 = vld [vmem:[%s1 + $0x8] sm:$0xff]
    %v235 = vld [vmem:[%s1 + $0x10] sm:$0xff]
    %v236 = vld [vmem:[%s1 + $0x18] sm:$0xff]
    %v237 = vld [vmem:[%s1 + $0x20] sm:$0xff]
    %v238 = vld [vmem:[%s1 + $0x28] sm:$0xff]
    %v239 = vld [vmem:[%s1 + $0x30] sm:$0xff]
    %v240 = vld [vmem:[%s1 + $0x38] sm:$0xff]
    %v241 = vld [vmem:[%s1 + $0x40] sm:$0xff]
    %v242 = vld [vmem:[%s1 + $0x48] sm:$0xff]
    %v243 = vld [vmem:[%s1 + $0x50] sm:$0xff]
    %v244 = vld [vmem:[%s1 + $0x58] sm:$0xff]
    %v245 = vld [vmem:[%s1 + $0x60] sm:$0xff]
    %v246 = vld [vmem:[%s1 + $0x68] sm:$0xff]
    %v247 = vld [vmem:[%s1 + $0x70] sm:$0xff]
    %v248 = vld [vmem:[%s1 + $0x78] sm:$0xff]
    %v249 = vld [vmem:[%s1 + $0x80] sm:$0xff]
    %v250 = vld [vmem:[%s1 + $0x88] sm:$0xff]
    %v251 = vld [vmem:[%s1 + $0x90] sm:$0xff]
    %v252 = vld [vmem:[%s1 + $0x98] sm:$0xff]
    %v253 = vld [vmem:[%s1 + $0xa0] sm:$0xff]
    %v254 = vld [vmem:[%s1 + $0xa8] sm:$0xff]
    %v255 = vld [vmem:[%s1 + $0xb0] sm:$0xff]
    %v256 = vld [vmem:[%s1 + $0xb8] sm:$0xff]
    %v257 = vld [vmem:[%s1 + $0xc0] sm:$0xff]
    %v258 = vld [vmem:[%s1 + $0xc8] sm:$0xff]
    %v259 = vld [vmem:[%s1 + $0xd0] sm:$0xff]
    %v260 = vld [vmem:[%s1 + $0xd8] sm:$0xff]
    %v261 = vld [vmem:[%s1 + $0xe0] sm:$0xff]
    %v262 = vld [vmem:[%s1 + $0xe8] sm:$0xff]
    %v263 = vld [vmem:[%s1 + $0xf0] sm:$0xff]
    %v264 = vld [vmem:[%s1 + $0xf8] sm:$0xff]
    %v265 = vld [vmem:[%s1 + $0x100] sm:$0xff]
    %v266 = vld [vmem:[%s1 + $0x108] sm:$0xff]
    %v267 = vld [vmem:[%s1 + $0x110] sm:$0xff]
    %v268 = vld [vmem:[%s1 + $0x118] sm:$0xff]
    %v269 = vlaneseq
    %v270 = vshrl.u32 %v269, 7
    %v271 = vsub.s32 0, %v270
    %v272 = vrot.slane %v37, %v271
    %v274 = vsel %vm194, %v223, 0
    %v277 = vsel %vm194, %v226, 0
    %v280 = vsel %vm194, %v229, 0
    %v283 = vsel %vm194, %v232, 0
    %285 = vmatprep.subr.mxu0 0.0
    %286 = vmatpush1.msra.mxu0 %v233
    %287 = vmatprep.subr.mxu0 0.0
    %288 = vmatpush1.msra.mxu0 %v234
    %289 = vmatprep.subr.mxu0 0.0
    %290 = vmatpush1.msra.mxu0 %v235
    %291 = vmatprep.subr.mxu0 0.0
    %292 = vmatpush1.msra.mxu0 %v236
    %293 = vmatprep.subr.mxu0 0.0
    %294 = vmatpush1.msra.mxu0 %v237
    %295 = vmatprep.subr.mxu0 0.0
    %296 = vmatpush1.msra.mxu0 %v238
    %297 = vmatprep.subr.mxu0 0.0
    %298 = vmatpush1.msra.mxu0 %v239
    %299 = vmatprep.subr.mxu0 0.0
    %300 = vmatpush1.msra.mxu0 %v240
    %301 = vmatprep.subr.mxu0 0.0
    %302 = vmatpush1.msra.mxu0 %v241
    %303 = vmatprep.subr.mxu0 0.0
    %304 = vmatpush1.msra.mxu0 %v242
    %305 = vmatprep.subr.mxu0 0.0
    %306 = vmatpush1.msra.mxu0 %v243
    %307 = vmatprep.subr.mxu0 0.0
    %308 = vmatpush1.msra.mxu0 %v244
    %309 = vmatprep.subr.mxu0 0.0
    %310 = vmatpush1.msra.mxu0 %v245
    %311 = vmatprep.subr.mxu0 0.0
    %312 = vmatpush1.msra.mxu0 %v246
    %313 = vmatprep.subr.mxu0 0.0
    %314 = vmatpush1.msra.mxu0 %v247
    %315 = vmatprep.subr.mxu0 0.0
    %316 = vmatpush1.msra.mxu0 %v248
    %317 = vmatprep.subr.mxu0 0.0
    %318 = vmatpush1.msra.mxu0 %v249
    %319 = vmatprep.subr.mxu0 0.0
    %320 = vmatpush1.msra.mxu0 %v250
    %321 = vmatprep.subr.mxu0 0.0
    %322 = vmatpush1.msra.mxu0 %v251
    %323 = vmatprep.subr.mxu0 0.0
    %324 = vmatpush1.msra.mxu0 %v252
    %325 = vmatprep.subr.mxu0 0.0
    %326 = vmatpush1.msra.mxu0 %v253
    %327 = vmatprep.subr.mxu0 0.0
    %328 = vmatpush1.msra.mxu0 %v254
    %329 = vmatprep.subr.mxu0 0.0
    %330 = vmatpush1.msra.mxu0 %v255
    %331 = vmatprep.subr.mxu0 0.0
    %332 = vmatpush1.msra.mxu0 %v256
    %333 = vmatprep.subr.mxu0 0.0
    %334 = vmatpush1.msra.mxu0 %v257
    %335 = vmatprep.subr.mxu0 0.0
    %336 = vmatpush1.msra.mxu0 %v258
    %337 = vmatprep.subr.mxu0 0.0
    %338 = vmatpush1.msra.mxu0 %v259
    %339 = vmatprep.subr.mxu0 0.0
    %340 = vmatpush1.msra.mxu0 %v260
    %341 = vmatprep.subr.mxu0 0.0
    %342 = vmatpush1.msra.mxu0 %v261
    %343 = vmatprep.subr.mxu0 0.0
    %344 = vmatpush1.msra.mxu0 %v262
    %345 = vmatprep.subr.mxu0 0.0
    %346 = vmatpush1.msra.mxu0 %v263
    %347 = vmatprep.subr.mxu0 0.0
    %348 = vmatpush1.msra.mxu0 %v264
    %349 = vmatprep.mubr.f32.mxu0 %v222
    %350 = vmatmul.mubr.f32.gmra.mrb[0].mxu0 %v221
    %v351 = vpop.f32.mrb[0].mxu0
    %v352 = vadd.f32 %v272, %v351
    %v353 = vpop.f32.mrb[0].mxu0
    %354 = vmatprep.mubr.f32.mxu0 %v225
    %355 = vmatmul.mubr.f32.gmra.mrb[0].mxu0 %v224
    %v356 = vpop.f32.mrb[0].mxu0
    %v357 = vadd.f32 %v272, %v356
    %v358 = vpop.f32.mrb[0].mxu0
    %359 = vmatprep.mubr.f32.mxu0 %v228
    %360 = vmatmul.mubr.f32.gmra.mrb[0].mxu0 %v227
    %v361 = vpop.f32.mrb[0].mxu0
    %v362 = vadd.f32 %v272, %v361
    %v363 = vpop.f32.mrb[0].mxu0
    %364 = vmatprep.mubr.f32.mxu0 %v231
    %365 = vmatmul.mubr.f32.gmra.mrb[0].mxu0 %v230
    %v366 = vpop.f32.mrb[0].mxu0
    %v367 = vadd.f32 %v272, %v366
    %v368 = vpop.f32.mrb[0].mxu0
    %369 = vdwg.mxu0
    %370 = vmatprep.subr.mxu0 0.0
    %371 = vmatpush1.msra.mxu0 %v265
    %372 = vmatprep.subr.mxu0 0.0
    %373 = vmatpush1.msra.mxu0 %v266
    %374 = vmatprep.subr.mxu0 0.0
    %375 = vmatpush1.msra.mxu0 %v267
    %376 = vmatprep.subr.mxu0 0.0
    %377 = vmatpush1.msra.mxu0 %v268
    %378 = vmatprep.subr.mxu0 0.0
    %379 = vmatpush1.msra.mxu0 0.0
    %380 = vmatprep.subr.mxu0 0.0
    %381 = vmatpush1.msra.mxu0 0.0
    %382 = vmatprep.subr.mxu0 0.0
    %383 = vmatpush1.msra.mxu0 0.0
    %384 = vmatprep.subr.mxu0 0.0
    %385 = vmatpush1.msra.mxu0 0.0
    %386 = vmatprep.subr.mxu0 0.0
    %387 = vmatpush1.msra.mxu0 0.0
    %388 = vmatprep.subr.mxu0 0.0
    %389 = vmatpush1.msra.mxu0 0.0
    %390 = vmatprep.subr.mxu0 0.0
    %391 = vmatpush1.msra.mxu0 0.0
    %392 = vmatprep.subr.mxu0 0.0
    %393 = vmatpush1.msra.mxu0 0.0
    %394 = vmatprep.subr.mxu0 0.0
    %395 = vmatpush1.msra.mxu0 0.0
    %396 = vmatprep.subr.mxu0 0.0
    %397 = vmatpush1.msra.mxu0 0.0
    %398 = vmatprep.subr.mxu0 0.0
    %399 = vmatpush1.msra.mxu0 0.0
    %400 = vmatprep.subr.mxu0 0.0
    %401 = vmatpush1.msra.mxu0 0.0
    %402 = vmatprep.subr.mxu0 0.0
    %403 = vmatpush1.msra.mxu0 0.0
    %404 = vmatprep.subr.mxu0 0.0
    %405 = vmatpush1.msra.mxu0 0.0
    %406 = vmatprep.subr.mxu0 0.0
    %407 = vmatpush1.msra.mxu0 0.0
    %408 = vmatprep.subr.mxu0 0.0
    %409 = vmatpush1.msra.mxu0 0.0
    %410 = vmatprep.subr.mxu0 0.0
    %411 = vmatpush1.msra.mxu0 0.0
    %412 = vmatprep.subr.mxu0 0.0
    %413 = vmatpush1.msra.mxu0 0.0
    %414 = vmatprep.subr.mxu0 0.0
    %415 = vmatpush1.msra.mxu0 0.0
    %416 = vmatprep.subr.mxu0 0.0
    %417 = vmatpush1.msra.mxu0 0.0
    %418 = vmatprep.subr.mxu0 0.0
    %419 = vmatpush1.msra.mxu0 0.0
    %420 = vmatprep.subr.mxu0 0.0
    %421 = vmatpush1.msra.mxu0 0.0
    %422 = vmatprep.subr.mxu0 0.0
    %423 = vmatpush1.msra.mxu0 0.0
    %424 = vmatprep.subr.mxu0 0.0
    %425 = vmatpush1.msra.mxu0 0.0
    %426 = vmatprep.subr.mxu0 0.0
    %427 = vmatpush1.msra.mxu0 0.0
    %428 = vmatprep.subr.mxu0 0.0
    %429 = vmatpush1.msra.mxu0 0.0
    %430 = vmatprep.subr.mxu0 0.0
    %431 = vmatpush1.msra.mxu0 0.0
    %432 = vmatprep.subr.mxu0 0.0
    %433 = vmatpush1.msra.mxu0 0.0
    %434 = vmatprep.mubr.f32.mxu0 0.0
    %435 = vmatmul.mubr.f32.gmra.mrb[0].mxu0 %v274
    %v436 = vpop.f32.mrb[0].mxu0
    %v437 = vadd.f32 %v352, %v436
    %v438 = vpop.f32.mrb[0].mxu0
    %439 = vmatprep.mubr.f32.mxu0 0.0
    %440 = vmatmul.mubr.f32.gmra.mrb[0].mxu0 %v277
    %v441 = vpop.f32.mrb[0].mxu0
    %v442 = vadd.f32 %v357, %v441
    %v443 = vpop.f32.mrb[0].mxu0
    %444 = vmatprep.mubr.f32.mxu0 0.0
    %445 = vmatmul.mubr.f32.gmra.mrb[0].mxu0 %v280
    %v446 = vpop.f32.mrb[0].mxu0
    %v447 = vadd.f32 %v362, %v446
    %v448 = vpop.f32.mrb[0].mxu0
    %449 = vmatprep.mubr.f32.mxu0 0.0
    %450 = vmatmul.mubr.f32.gmra.mrb[0].mxu0 %v283
    %v451 = vpop.f32.mrb[0].mxu0
    %v452 = vadd.f32 %v367, %v451
    %v453 = vpop.f32.mrb[0].mxu0
    %454 = vdwg.mxu0
    %v455 = vsel %vm194, %v437, 0.0
    %v456 = vsel %vm194, %v442, 0.0
    %v457 = vadd.f32 %v455, %v456
    %v458 = vsel %vm194, %v447, 0.0
    %v459 = vadd.f32 %v457, %v458
    %v460 = vsel %vm194, %v452, 0.0
    %v461 = vadd.f32 %v459, %v460
    %v462 = vrot.slane %v461, 4
    %v463 = vadd.f32 %v461, %v462
    %v464 = vrot.slane %v463, 2
    %v465 = vadd.f32 %v463, %v464
    %v466 = vrot.slane %v465, 1
    %v467 = vadd.f32 %v465, %v466
    %v468 = vmul.f32 %v437, %v437
    %v469 = vmul.f32 %v442, %v442
    %v470 = vmul.f32 %v447, %v447
    %v471 = vmul.f32 %v452, %v452
    %v472 = vsel %vm194, %v468, 0.0
    %v473 = vsel %vm194, %v469, 0.0
    %v474 = vadd.f32 %v472, %v473
    %v475 = vsel %vm194, %v470, 0.0
    %v476 = vadd.f32 %v474, %v475
    %v477 = vsel %vm194, %v471, 0.0
    %v478 = vadd.f32 %v476, %v477
    %v479 = vrot.slane %v478, 4
    %v480 = vadd.f32 %v478, %v479
    %v481 = vrot.slane %v480, 2
    %v482 = vadd.f32 %v480, %v481
    %v483 = vrot.slane %v482, 1
    %v484 = vadd.f32 %v482, %v483
    %v485 = vmul.f32 %v467, 0.03125
    %v486 = vmul.f32 %v484, 0.03125
    %v487 = vmul.f32 %v485, %v485
    %v488 = vsub.f32 %v486, %v487
    %v489 = vsub.f32 %v437, %v485
    %v490 = vsub.f32 %v442, %v485
    %v491 = vsub.f32 %v447, %v485
    %v492 = vsub.f32 %v452, %v485
    %v493 = vadd.f32 %v488, 1e-05
    %v494 = vrsqrt.pop %v493
    %v495 = vmul.f32 %v489, %v494
    %v496 = vmul.f32 %v490, %v494
    %v497 = vmul.f32 %v491, %v494
    %v498 = vmul.f32 %v492, %v494
    %v499 = vlaneseq
    %v500 = vshrl.u32 %v499, 7
    %v501 = vsub.s32 1, %v500
    %v502 = vrot.slane %v37, %v501
    %v503 = vmul.f32 %v495, %v502
    %v504 = vmul.f32 %v496, %v502
    %v505 = vmul.f32 %v497, %v502
    %v506 = vmul.f32 %v498, %v502
    %v507 = vlaneseq
    %v508 = vshrl.u32 %v507, 7
    %v509 = vsub.s32 2, %v508
    %v510 = vrot.slane %v37, %v509
    %v511 = vadd.f32 %v503, %v510
    %v512 = vadd.f32 %v504, %v510
    %v513 = vadd.f32 %v505, %v510
    %v514 = vadd.f32 %v506, %v510
    %v515 = vmax.f32 %v511, 0.0
    %v516 = vmax.f32 %v512, 0.0
    %v517 = vmax.f32 %v513, 0.0
    %v518 = vmax.f32 %v514, 0.0
    %v523 = vrot.slane %v515, 3
    %v524 = vrot.slane %v516, 3
    %v525 = vsel %vm42, %v523, %v524
    %v526 = vrot.slane %v517, 3
    %v527 = vsel %vm42, %v524, %v526
    %v528 = vrot.slane %v518, 3
    %v529 = vsel %vm42, %v526, %v528
    %v535 = vsel %vm42, 0.0, %v523
    %v536 = vsel %vm42, %v528, 0.0
    %v539 = vrot.slane %v535, 1
    %v540 = vrot.slane %v525, 1
    %v541 = vsel %vm59, %v539, %v540
    %v542 = vrot.slane %v527, 1
    %v543 = vsel %vm59, %v540, %v542
    %v544 = vrot.slane %v529, 1
    %v545 = vsel %vm59, %v542, %v544
    %v546 = vrot.slane %v536, 1
    %v547 = vsel %vm59, %v544, %v546
    %548 = vrot.lane.b32.xlu0 %v541, 32
    %v549 = vpop.permute.xlu0 %548
    %550 = vrot.lane.b32.xlu0 %v543, 32
    %v551 = vpop.permute.xlu0 %550
    %552 = vrot.lane.b32.xlu0 %v545, 32
    %v553 = vpop.permute.xlu0 %552
    %554 = vrot.lane.b32.xlu0 %v547, 32
    %v555 = vpop.permute.xlu0 %554
    %v560 = vrot.slane %v535, 2
    %v561 = vrot.slane %v525, 2
    %v562 = vsel %vm81, %v560, %v561
    %v563 = vrot.slane %v527, 2
    %v564 = vsel %vm81, %v561, %v563
    %v565 = vrot.slane %v529, 2
    %v566 = vsel %vm81, %v563, %v565
    %v567 = vrot.slane %v536, 2
    %v568 = vsel %vm81, %v565, %v567
    %569 = vrot.lane.b32.xlu0 %v562, 64
    %v570 = vpop.permute.xlu0 %569
    %571 = vrot.lane.b32.xlu0 %v564, 64
    %v572 = vpop.permute.xlu0 %571
    %573 = vrot.lane.b32.xlu0 %v566, 64
    %v574 = vpop.permute.xlu0 %573
    %575 = vrot.lane.b32.xlu0 %v568, 64
    %v576 = vpop.permute.xlu0 %575
    %v581 = vrot.slane %v535, 4
    %v582 = vrot.slane %v525, 4
    %v583 = vsel %vm103, %v581, %v582
    %v584 = vrot.slane %v527, 4
    %v585 = vsel %vm103, %v582, %v584
    %v586 = vrot.slane %v529, 4
    %v587 = vsel %vm103, %v584, %v586
    %v588 = vrot.slane %v536, 4
    %v589 = vsel %vm103, %v586, %v588
    %590 = vrot.lane.b32.xlu0 %v583, 96
    %v591 = vpop.permute.xlu0 %590
    %592 = vrot.lane.b32.xlu0 %v585, 96
    %v593 = vpop.permute.xlu0 %592
    %594 = vrot.lane.b32.xlu0 %v587, 96
    %v595 = vpop.permute.xlu0 %594
    %596 = vrot.lane.b32.xlu0 %v589, 96
    %v597 = vpop.permute.xlu0 %596
    %v602 = vrot.slane %v535, 5
    %v603 = vrot.slane %v525, 5
    %v604 = vsel %vm125, %v602, %v603
    %v605 = vrot.slane %v527, 5
    %v606 = vsel %vm125, %v603, %v605
    %v607 = vrot.slane %v529, 5
    %v608 = vsel %vm125, %v605, %v607
    %v609 = vrot.slane %v536, 5
    %v610 = vsel %vm125, %v607, %v609
    %v615 = vrot.slane %v535, 6
    %v616 = vrot.slane %v525, 6
    %v617 = vsel %vm139, %v615, %v616
    %v618 = vrot.slane %v527, 6
    %v619 = vsel %vm139, %v616, %v618
    %v620 = vrot.slane %v529, 6
    %v621 = vsel %vm139, %v618, %v620
    %v622 = vrot.slane %v536, 6
    %v623 = vsel %vm139, %v620, %v622
    %624 = vrot.lane.b32.xlu0 %v617, 32
    %v625 = vpop.permute.xlu0 %624
    %626 = vrot.lane.b32.xlu0 %v619, 32
    %v627 = vpop.permute.xlu0 %626
    %628 = vrot.lane.b32.xlu0 %v621, 32
    %v629 = vpop.permute.xlu0 %628
    %630 = vrot.lane.b32.xlu0 %v623, 32
    %v631 = vpop.permute.xlu0 %630
    %636 = vrot.lane.b32.xlu0 %v525, 64
    %v637 = vpop.permute.xlu0 %636
    %638 = vrot.lane.b32.xlu0 %v527, 64
    %v639 = vpop.permute.xlu0 %638
    %640 = vrot.lane.b32.xlu0 %v529, 64
    %v641 = vpop.permute.xlu0 %640
    %642 = vrot.lane.b32.xlu0 %v536, 64
    %v643 = vpop.permute.xlu0 %642
    %v648 = vsel %vm59, %v546, %v174
    %649 = vrot.lane.b32.xlu0 %v543, 96
    %v650 = vpop.permute.xlu0 %649
    %651 = vrot.lane.b32.xlu0 %v545, 96
    %v652 = vpop.permute.xlu0 %651
    %653 = vrot.lane.b32.xlu0 %v547, 96
    %v654 = vpop.permute.xlu0 %653
    %655 = vrot.lane.b32.xlu0 %v648, 96
    %v656 = vpop.permute.xlu0 %655
    %v661 = vsel %vm81, %v567, %v188
    %v666 = vsel %vm194, %v535, %v549
    %v667 = vsel %vm194, %v525, %v551
    %v668 = vsel %vm194, %v527, %v553
    %v669 = vsel %vm194, %v529, %v555
    %v670 = vsel %vm199, %v666, %v570
    %v671 = vsel %vm199, %v667, %v572
    %v672 = vsel %vm199, %v668, %v574
    %v673 = vsel %vm199, %v669, %v576
    %v674 = vsel %vm204, %v670, %v591
    %v675 = vsel %vm204, %v671, %v593
    %v676 = vsel %vm204, %v672, %v595
    %v677 = vsel %vm204, %v673, %v597
    %v678 = vsel %vm194, %v604, %v625
    %v679 = vsel %vm194, %v606, %v627
    %v680 = vsel %vm194, %v608, %v629
    %v681 = vsel %vm194, %v610, %v631
    %v682 = vsel %vm199, %v678, %v637
    %v683 = vsel %vm199, %v679, %v639
    %v684 = vsel %vm199, %v680, %v641
    %v685 = vsel %vm199, %v681, %v643
    %v686 = vsel %vm204, %v682, %v650
    %v687 = vsel %vm204, %v683, %v652
    %v688 = vsel %vm204, %v684, %v654
    %v689 = vsel %vm204, %v685, %v656
    %v690 = vmul.f32 %v674, %v25
    %v691 = vmul.f32 %v686, %v26
    %v692 = vmul.f32 %v564, %v27
    %v693 = vmul.f32 %v675, %v28
    %v694 = vmul.f32 %v687, %v29
    %v695 = vmul.f32 %v566, %v30
    %v696 = vmul.f32 %v676, %v31
    %v697 = vmul.f32 %v688, %v32
    %v698 = vmul.f32 %v568, %v33
    %v699 = vmul.f32 %v677, %v34
    %v700 = vmul.f32 %v689, %v35
    %v701 = vmul.f32 %v661, %v36
    %v702 = vld [vmem:[%s2] sm:$0xff]
    %v703 = vld [vmem:[%s2 + $0x8] sm:$0xff]
    %v704 = vld [vmem:[%s2 + $0x10] sm:$0xff]
    %v705 = vld [vmem:[%s2 + $0x18] sm:$0xff]
    %v706 = vld [vmem:[%s2 + $0x20] sm:$0xff]
    %v707 = vld [vmem:[%s2 + $0x28] sm:$0xff]
    %v708 = vld [vmem:[%s2 + $0x30] sm:$0xff]
    %v709 = vld [vmem:[%s2 + $0x38] sm:$0xff]
    %v710 = vld [vmem:[%s2 + $0x40] sm:$0xff]
    %v711 = vld [vmem:[%s2 + $0x48] sm:$0xff]
    %v712 = vld [vmem:[%s2 + $0x50] sm:$0xff]
    %v713 = vld [vmem:[%s2 + $0x58] sm:$0xff]
    %v714 = vld [vmem:[%s2 + $0x60] sm:$0xff]
    %v715 = vld [vmem:[%s2 + $0x68] sm:$0xff]
    %v716 = vld [vmem:[%s2 + $0x70] sm:$0xff]
    %v717 = vld [vmem:[%s2 + $0x78] sm:$0xff]
    %v718 = vld [vmem:[%s2 + $0x80] sm:$0xff]
    %v719 = vld [vmem:[%s2 + $0x88] sm:$0xff]
    %v720 = vld [vmem:[%s2 + $0x90] sm:$0xff]
    %v721 = vld [vmem:[%s2 + $0x98] sm:$0xff]
    %v722 = vld [vmem:[%s2 + $0xa0] sm:$0xff]
    %v723 = vld [vmem:[%s2 + $0xa8] sm:$0xff]
    %v724 = vld [vmem:[%s2 + $0xb0] sm:$0xff]
    %v725 = vld [vmem:[%s2 + $0xb8] sm:$0xff]
    %v726 = vld [vmem:[%s2 + $0xc0] sm:$0xff]
    %v727 = vld [vmem:[%s2 + $0xc8] sm:$0xff]
    %v728 = vld [vmem:[%s2 + $0xd0] sm:$0xff]
    %v729 = vld [vmem:[%s2 + $0xd8] sm:$0xff]
    %v730 = vld [vmem:[%s2 + $0xe0] sm:$0xff]
    %v731 = vld [vmem:[%s2 + $0xe8] sm:$0xff]
    %v732 = vld [vmem:[%s2 + $0xf0] sm:$0xff]
    %v733 = vld [vmem:[%s2 + $0xf8] sm:$0xff]
    %v734 = vld [vmem:[%s2 + $0x100] sm:$0xff]
    %v735 = vld [vmem:[%s2 + $0x108] sm:$0xff]
    %v736 = vld [vmem:[%s2 + $0x110] sm:$0xff]
    %v737 = vld [vmem:[%s2 + $0x118] sm:$0xff]
    %v738 = vlaneseq
    %v739 = vshrl.u32 %v738, 7
    %v740 = vsub.s32 3, %v739
    %v741 = vrot.slane %v37, %v740
    %v743 = vsel %vm194, %v692, 0
    %v746 = vsel %vm194, %v695, 0
    %v749 = vsel %vm194, %v698, 0
    %v752 = vsel %vm194, %v701, 0
    %754 = vmatprep.subr.mxu0 0.0
    %755 = vmatpush1.msra.mxu0 %v702
    %756 = vmatprep.subr.mxu0 0.0
    %757 = vmatpush1.msra.mxu0 %v703
    %758 = vmatprep.subr.mxu0 0.0
    %759 = vmatpush1.msra.mxu0 %v704
    %760 = vmatprep.subr.mxu0 0.0
    %761 = vmatpush1.msra.mxu0 %v705
    %762 = vmatprep.subr.mxu0 0.0
    %763 = vmatpush1.msra.mxu0 %v706
    %764 = vmatprep.subr.mxu0 0.0
    %765 = vmatpush1.msra.mxu0 %v707
    %766 = vmatprep.subr.mxu0 0.0
    %767 = vmatpush1.msra.mxu0 %v708
    %768 = vmatprep.subr.mxu0 0.0
    %769 = vmatpush1.msra.mxu0 %v709
    %770 = vmatprep.subr.mxu0 0.0
    %771 = vmatpush1.msra.mxu0 %v710
    %772 = vmatprep.subr.mxu0 0.0
    %773 = vmatpush1.msra.mxu0 %v711
    %774 = vmatprep.subr.mxu0 0.0
    %775 = vmatpush1.msra.mxu0 %v712
    %776 = vmatprep.subr.mxu0 0.0
    %777 = vmatpush1.msra.mxu0 %v713
    %778 = vmatprep.subr.mxu0 0.0
    %779 = vmatpush1.msra.mxu0 %v714
    %780 = vmatprep.subr.mxu0 0.0
    %781 = vmatpush1.msra.mxu0 %v715
    %782 = vmatprep.subr.mxu0 0.0
    %783 = vmatpush1.msra.mxu0 %v716
    %784 = vmatprep.subr.mxu0 0.0
    %785 = vmatpush1.msra.mxu0 %v717
    %786 = vmatprep.subr.mxu0 0.0
    %787 = vmatpush1.msra.mxu0 %v718
    %788 = vmatprep.subr.mxu0 0.0
    %789 = vmatpush1.msra.mxu0 %v719
    %790 = vmatprep.subr.mxu0 0.0
    %791 = vmatpush1.msra.mxu0 %v720
    %792 = vmatprep.subr.mxu0 0.0
    %793 = vmatpush1.msra.mxu0 %v721
    %794 = vmatprep.subr.mxu0 0.0
    %795 = vmatpush1.msra.mxu0 %v722
    %796 = vmatprep.subr.mxu0 0.0
    %797 = vmatpush1.msra.mxu0 %v723
    %798 = vmatprep.subr.mxu0 0.0
    %799 = vmatpush1.msra.mxu0 %v724
    %800 = vmatprep.subr.mxu0 0.0
    %801 = vmatpush1.msra.mxu0 %v725
    %802 = vmatprep.subr.mxu0 0.0
    %803 = vmatpush1.msra.mxu0 %v726
    %804 = vmatprep.subr.mxu0 0.0
    %805 = vmatpush1.msra.mxu0 %v727
    %806 = vmatprep.subr.mxu0 0.0
    %807 = vmatpush1.msra.mxu0 %v728
    %808 = vmatprep.subr.mxu0 0.0
    %809 = vmatpush1.msra.mxu0 %v729
    %810 = vmatprep.subr.mxu0 0.0
    %811 = vmatpush1.msra.mxu0 %v730
    %812 = vmatprep.subr.mxu0 0.0
    %813 = vmatpush1.msra.mxu0 %v731
    %814 = vmatprep.subr.mxu0 0.0
    %815 = vmatpush1.msra.mxu0 %v732
    %816 = vmatprep.subr.mxu0 0.0
    %817 = vmatpush1.msra.mxu0 %v733
    %818 = vmatprep.mubr.f32.mxu0 %v691
    %819 = vmatmul.mubr.f32.gmra.mrb[0].mxu0 %v690
    %v820 = vpop.f32.mrb[0].mxu0
    %v821 = vadd.f32 %v741, %v820
    %v822 = vpop.f32.mrb[0].mxu0
    %823 = vmatprep.mubr.f32.mxu0 %v694
    %824 = vmatmul.mubr.f32.gmra.mrb[0].mxu0 %v693
    %v825 = vpop.f32.mrb[0].mxu0
    %v826 = vadd.f32 %v741, %v825
    %v827 = vpop.f32.mrb[0].mxu0
    %828 = vmatprep.mubr.f32.mxu0 %v697
    %829 = vmatmul.mubr.f32.gmra.mrb[0].mxu0 %v696
    %v830 = vpop.f32.mrb[0].mxu0
    %v831 = vadd.f32 %v741, %v830
    %v832 = vpop.f32.mrb[0].mxu0
    %833 = vmatprep.mubr.f32.mxu0 %v700
    %834 = vmatmul.mubr.f32.gmra.mrb[0].mxu0 %v699
    %v835 = vpop.f32.mrb[0].mxu0
    %v836 = vadd.f32 %v741, %v835
    %v837 = vpop.f32.mrb[0].mxu0
    %838 = vdwg.mxu0
    %839 = vmatprep.subr.mxu0 0.0
    %840 = vmatpush1.msra.mxu0 %v734
    %841 = vmatprep.subr.mxu0 0.0
    %842 = vmatpush1.msra.mxu0 %v735
    %843 = vmatprep.subr.mxu0 0.0
    %844 = vmatpush1.msra.mxu0 %v736
    %845 = vmatprep.subr.mxu0 0.0
    %846 = vmatpush1.msra.mxu0 %v737
    %847 = vmatprep.subr.mxu0 0.0
    %848 = vmatpush1.msra.mxu0 0.0
    %849 = vmatprep.subr.mxu0 0.0
    %850 = vmatpush1.msra.mxu0 0.0
    %851 = vmatprep.subr.mxu0 0.0
    %852 = vmatpush1.msra.mxu0 0.0
    %853 = vmatprep.subr.mxu0 0.0
    %854 = vmatpush1.msra.mxu0 0.0
    %855 = vmatprep.subr.mxu0 0.0
    %856 = vmatpush1.msra.mxu0 0.0
    %857 = vmatprep.subr.mxu0 0.0
    %858 = vmatpush1.msra.mxu0 0.0
    %859 = vmatprep.subr.mxu0 0.0
    %860 = vmatpush1.msra.mxu0 0.0
    %861 = vmatprep.subr.mxu0 0.0
    %862 = vmatpush1.msra.mxu0 0.0
    %863 = vmatprep.subr.mxu0 0.0
    %864 = vmatpush1.msra.mxu0 0.0
    %865 = vmatprep.subr.mxu0 0.0
    %866 = vmatpush1.msra.mxu0 0.0
    %867 = vmatprep.subr.mxu0 0.0
    %868 = vmatpush1.msra.mxu0 0.0
    %869 = vmatprep.subr.mxu0 0.0
    %870 = vmatpush1.msra.mxu0 0.0
    %871 = vmatprep.subr.mxu0 0.0
    %872 = vmatpush1.msra.mxu0 0.0
    %873 = vmatprep.subr.mxu0 0.0
    %874 = vmatpush1.msra.mxu0 0.0
    %875 = vmatprep.subr.mxu0 0.0
    %876 = vmatpush1.msra.mxu0 0.0
    %877 = vmatprep.subr.mxu0 0.0
    %878 = vmatpush1.msra.mxu0 0.0
    %879 = vmatprep.subr.mxu0 0.0
    %880 = vmatpush1.msra.mxu0 0.0
    %881 = vmatprep.subr.mxu0 0.0
    %882 = vmatpush1.msra.mxu0 0.0
    %883 = vmatprep.subr.mxu0 0.0
    %884 = vmatpush1.msra.mxu0 0.0
    %885 = vmatprep.subr.mxu0 0.0
    %886 = vmatpush1.msra.mxu0 0.0
    %887 = vmatprep.subr.mxu0 0.0
    %888 = vmatpush1.msra.mxu0 0.0
    %889 = vmatprep.subr.mxu0 0.0
    %890 = vmatpush1.msra.mxu0 0.0
    %891 = vmatprep.subr.mxu0 0.0
    %892 = vmatpush1.msra.mxu0 0.0
    %893 = vmatprep.subr.mxu0 0.0
    %894 = vmatpush1.msra.mxu0 0.0
    %895 = vmatprep.subr.mxu0 0.0
    %896 = vmatpush1.msra.mxu0 0.0
    %897 = vmatprep.subr.mxu0 0.0
    %898 = vmatpush1.msra.mxu0 0.0
    %899 = vmatprep.subr.mxu0 0.0
    %900 = vmatpush1.msra.mxu0 0.0
    %901 = vmatprep.subr.mxu0 0.0
    %902 = vmatpush1.msra.mxu0 0.0
    %903 = vmatprep.mubr.f32.mxu0 0.0
    %904 = vmatmul.mubr.f32.gmra.mrb[0].mxu0 %v743
    %v905 = vpop.f32.mrb[0].mxu0
    %v906 = vadd.f32 %v821, %v905
    %v907 = vpop.f32.mrb[0].mxu0
    %908 = vmatprep.mubr.f32.mxu0 0.0
    %909 = vmatmul.mubr.f32.gmra.mrb[0].mxu0 %v746
    %v910 = vpop.f32.mrb[0].mxu0
    %v911 = vadd.f32 %v826, %v910
    %v912 = vpop.f32.mrb[0].mxu0
    %913 = vmatprep.mubr.f32.mxu0 0.0
    %914 = vmatmul.mubr.f32.gmra.mrb[0].mxu0 %v749
    %v915 = vpop.f32.mrb[0].mxu0
    %v916 = vadd.f32 %v831, %v915
    %v917 = vpop.f32.mrb[0].mxu0
    %918 = vmatprep.mubr.f32.mxu0 0.0
    %919 = vmatmul.mubr.f32.gmra.mrb[0].mxu0 %v752
    %v920 = vpop.f32.mrb[0].mxu0
    %v921 = vadd.f32 %v836, %v920
    %v922 = vpop.f32.mrb[0].mxu0
    %923 = vdwg.mxu0
    %v924 = vsel %vm194, %v906, 0.0
    %v925 = vsel %vm194, %v911, 0.0
    %v926 = vadd.f32 %v924, %v925
    %v927 = vsel %vm194, %v916, 0.0
    %v928 = vadd.f32 %v926, %v927
    %v929 = vsel %vm194, %v921, 0.0
    %v930 = vadd.f32 %v928, %v929
    %v931 = vrot.slane %v930, 4
    %v932 = vadd.f32 %v930, %v931
    %v933 = vrot.slane %v932, 2
    %v934 = vadd.f32 %v932, %v933
    %v935 = vrot.slane %v934, 1
    %v936 = vadd.f32 %v934, %v935
    %v937 = vmul.f32 %v906, %v906
    %v938 = vmul.f32 %v911, %v911
    %v939 = vmul.f32 %v916, %v916
    %v940 = vmul.f32 %v921, %v921
    %v941 = vsel %vm194, %v937, 0.0
    %v942 = vsel %vm194, %v938, 0.0
    %v943 = vadd.f32 %v941, %v942
    %v944 = vsel %vm194, %v939, 0.0
    %v945 = vadd.f32 %v943, %v944
    %v946 = vsel %vm194, %v940, 0.0
    %v947 = vadd.f32 %v945, %v946
    %v948 = vrot.slane %v947, 4
    %v949 = vadd.f32 %v947, %v948
    %v950 = vrot.slane %v949, 2
    %v951 = vadd.f32 %v949, %v950
    %v952 = vrot.slane %v951, 1
    %v953 = vadd.f32 %v951, %v952
    %v954 = vmul.f32 %v936, 0.03125
    %v955 = vmul.f32 %v953, 0.03125
    %v956 = vmul.f32 %v954, %v954
    %v957 = vsub.f32 %v955, %v956
    %v958 = vsub.f32 %v906, %v954
    %v959 = vsub.f32 %v911, %v954
    %v960 = vsub.f32 %v916, %v954
    %v961 = vsub.f32 %v921, %v954
    %v962 = vadd.f32 %v957, 1e-05
    %v963 = vrsqrt.pop %v962
    %v964 = vmul.f32 %v958, %v963
    %v965 = vmul.f32 %v959, %v963
    %v966 = vmul.f32 %v960, %v963
    %v967 = vmul.f32 %v961, %v963
    %v968 = vlaneseq
    %v969 = vshrl.u32 %v968, 7
    %v970 = vsub.s32 4, %v969
    %v971 = vrot.slane %v37, %v970
    %v972 = vmul.f32 %v964, %v971
    %v973 = vmul.f32 %v965, %v971
    %v974 = vmul.f32 %v966, %v971
    %v975 = vmul.f32 %v967, %v971
    %v976 = vlaneseq
    %v977 = vshrl.u32 %v976, 7
    %v978 = vsub.s32 5, %v977
    %v979 = vrot.slane %v37, %v978
    %v980 = vadd.f32 %v972, %v979
    %v981 = vadd.f32 %v973, %v979
    %v982 = vadd.f32 %v974, %v979
    %v983 = vadd.f32 %v975, %v979
    %v984 = vadd.f32 %v980, %v21
    %v985 = vadd.f32 %v981, %v22
    %v986 = vadd.f32 %v982, %v23
    %v987 = vadd.f32 %v983, %v24
    %v988 = vmax.f32 %v984, 0.0
    %v989 = vmax.f32 %v985, 0.0
    %v990 = vmax.f32 %v986, 0.0
    %v991 = vmax.f32 %v987, 0.0
    %992 = vst.msk [vmem:[#allocation2] sm:$0xff] %vm194, %v988
    %993 = vst.msk [vmem:[#allocation2 + $0x8] sm:$0xff] %vm194, %v989
    %994 = vst.msk [vmem:[#allocation2 + $0x10] sm:$0xff] %vm194, %v990
    %995 = vst.msk [vmem:[#allocation2 + $0x18] sm:$0xff] %vm194, %v991
    // Predicated region
    $region22: #{tpu_custom_call.1} parent=1 // pred_check
      _
    $region23: #{tpu_custom_call.1} parent=1 // pred_check_branch
      %997 = sbr.rel (0) target = $region25
    $region24: #{tpu_custom_call.1} parent=1 // pred_region
      %s999 = ssub.s32 512, 512
      %1000 = vsyncadd [#allocation3], %s999
      %s1001 = sshll.u32 [#allocation2], 4
      %s1002 = int_to_ptr.vmem [resolvable:$true] %s1001
      %1007 = dma.vmem_to_hbm [thread:$0]  %s1002, 512, %s5, [#allocation3], 128, 128, 8
    $region25: #{tpu_custom_call.1} parent=1 // pred_fallthru
      _
    // Predicated region
    $region26: #{tpu_custom_call.1} parent=1 // pred_check
      _
    $region27: #{tpu_custom_call.1} parent=1 // pred_check_branch
      %1009 = sbr.rel (0) target = $region29
    $region28: #{tpu_custom_call.1} parent=1 // pred_region
      %1010 = dma.done [#allocation3], 512
    $region29: #{tpu_custom_call.1} parent=1 // pred_fallthru
      _
    %1011 = vsyncpa [#allocation3], 1

</llo_original>
